<compile_context>
chip_gen: v7x
topology: tpu7x:2x2x1
jax: 0.10.0
libtpu: 0.0.40
codegen_flags: <defaults>
</compile_context>

<pallas_src>
import jax
import jax.numpy as jnp
from jax.experimental import pallas as pl
from jax.experimental.pallas import tpu as pltpu


_LANES = 128
_SUBLANES = 8
_TARGET_LIVE_BYTES = 24 * 1024 * 1024   # ~4 MiB/tile * 6 live buffers (f32/f32)
_VMEM_LIMIT_BYTES = 32 * 1024 * 1024    # fits v7x's 64 MiB physical VMEM


def _blend_kernel(q_ref, w_ref, wt_ref, o_ref):
    # new_w = wt * q + (1 - wt) * w, accumulated in f32, single cast at store.
    wt = wt_ref[0]            # weightage      (f32, SMEM)
    omw = wt_ref[1]           # 1 - weightage  (f32, SMEM)
    qf = q_ref[...].astype(jnp.float32)
    wf = w_ref[...].astype(jnp.float32)
    o_ref[...] = (wt * qf + omw * wf).astype(o_ref.dtype)


def _choose_tile_rows(s_rows, s_cols, q_itemsize, w_itemsize, max_tile_rows):
    """Row-tile size: ~24 MiB live VMEM, multiple of 8, >=2 tiles when possible."""
    bytes_per_row = s_cols * (q_itemsize + 2 * w_itemsize)       # q + w + out
    tm = _TARGET_LIVE_BYTES // max(1, 2 * bytes_per_row)          # 2x: double buf
    if max_tile_rows is not None:
        tm = min(tm, max_tile_rows)
    if tm >= s_rows:
        # Whole array would fit one tile; still split >= 2 ways so both v7x
        # TensorCores get a stream (extra ~0.35us/step is negligible on 1-TC chips).
        if s_rows >= 2 * _SUBLANES:
            tm = max(_SUBLANES, ((s_rows // 2) // _SUBLANES) * _SUBLANES)
        else:
            tm = s_rows                                           # full extent
    else:
        tm = max(_SUBLANES, (tm // _SUBLANES) * _SUBLANES)
        if tm > s_rows:
            tm = s_rows
    return tm


def _pallas_blend(q, w, weightage, *, max_tile_rows=None, donate_w=False):
    """weightage * q + (1 - weightage) * w via a row-tiled, pipelined kernel.

    q may be f32 while w is bf16; the cast to w.dtype happens inside the kernel.
    Set donate_w=True only if the caller donates w (e.g. jit donate_argnums);
    otherwise XLA would insert a defensive copy that costs a full HBM pass.
    """
    rows, cols = w.shape
    out_dtype = w.dtype
    wt = jnp.asarray(weightage, dtype=jnp.float32)
    wt_arr = jnp.stack([wt, 1.0 - wt])                            # (2,) f32 -> SMEM

    # Prefer a lane-dense layout, but never pay extra HBM passes for it:
    #  - already (rows%8, cols%128) aligned  -> stream as-is
    #  - total elements divisible by 8*128   -> free reshape to (S, 128)
    #  - otherwise                           -> keep 2-D, full-extent last dim
    lane_ok = (cols % _LANES == 0) and (rows % _SUBLANES == 0)
    can_flatten = (not lane_ok) and ((rows * cols) % (_SUBLANES * _LANES) == 0)
    if can_flatten:
        q2 = q.reshape(-1, _LANES)
        w2 = w.reshape(-1, _LANES)
        flattened = True
    else:
        q2, w2 = q, w
        flattened = False
    s_rows, s_cols = w2.shape

    tm = _choose_tile_rows(
        s_rows, s_cols,
        jnp.dtype(q2.dtype).itemsize, jnp.dtype(out_dtype).itemsize,
        max_tile_rows)
    grid = (pl.cdiv(s_rows, tm),)

    # Aliasing the reshaped temporary buys nothing, so only alias the native path.
    io_aliases = {1: 0} if (donate_w and not flattened) else {}

    out = pl.pallas_call(
        _blend_kernel,
        out_shape=jax.ShapeDtypeStruct((s_rows, s_cols), out_dtype),
        grid=grid,
        in_specs=[
            pl.BlockSpec((tm, s_cols), lambda i: (i, 0)),          # q (f32)
            pl.BlockSpec((tm, s_cols), lambda i: (i, 0)),          # w (weight dtype)
            pl.BlockSpec(memory_space=pltpu.MemorySpace.SMEM),     # [wt, 1-wt]
        ],
        out_specs=pl.BlockSpec((tm, s_cols), lambda i: (i, 0)),
        input_output_aliases=io_aliases,
        compiler_params=pltpu.CompilerParams(
            dimension_semantics=("parallel",),   # v7x: row tiles split over both TCs
            vmem_limit_bytes=_VMEM_LIMIT_BYTES,
        ),
    )(q2, w2, wt_arr)

    if flattened:
        out = out.reshape(rows, cols)
    return out


def orthogonal_weights_forward(w, key, *, weightage, axis,
                               min_pallas_bytes=256 * 1024):
    """JAX/Pallas port of OrthogonalWeights.forward.

    w:   (rows, cols) 2-D weight matrix, same dense layout as PyTorch.
    key: jax PRNG key standing in for torch's global RNG (torch.randn).
    """
    if axis == 1:
        w = w.T  # glue: transpose outside the kernel
    rows, cols = w.shape

    # Like the PyTorch module, the q.T.reshape below is only well-defined when
    # max(rows, cols) < 2 * min(rows, cols) (square in practice).
    if max(rows, cols) // min(rows, cols) != 1:
        raise ValueError(
            "OrthogonalWeights requires max(rows, cols) < 2 * min(rows, cols); "
            f"got {(rows, cols)}")

    if rows > cols:
        flat_shape = (rows, rows // cols * cols)
    else:
        flat_shape = (cols // rows * rows, cols)

    # TODO(synk): torch.randn / torch.svd have no Pallas equivalent; the random
    # orthogonal basis is built with plain JAX (jnp.linalg.svd) glue.
    a = jax.random.normal(key, flat_shape, dtype=jnp.float32)
    u, _, vh = jnp.linalg.svd(a, full_matrices=False)
    q = u if rows > cols else vh.T          # torch.svd returns V; jnp returns V^H
    q = q.T.reshape(w.shape)[:rows, :cols]  # stays f32; cast happens in-kernel

    # Tiny weights: pallas_call fixed overhead dominates -> let XLA fuse the
    # blend into the SVD/transpose epilogue.
    if rows * cols * jnp.dtype(w.dtype).itemsize < min_pallas_bytes:
        wt = jnp.asarray(weightage, dtype=jnp.float32)
        return (wt * q + (1.0 - wt) * w.astype(jnp.float32)).astype(w.dtype)

    return _pallas_blend(q, w, weightage)


def _reference_forward(w, key, *, weightage, axis):
    """Pure-JAX reference of the same forward pass (f32 accumulate, cast once)."""
    if axis == 1:
        w = w.T
    rows, cols = w.shape
    if rows > cols:
        flat_shape = (rows, rows // cols * cols)
    else:
        flat_shape = (cols // rows * rows, cols)
    a = jax.random.normal(key, flat_shape, dtype=jnp.float32)
    u, _, vh = jnp.linalg.svd(a, full_matrices=False)
    q = u if rows > cols else vh.T
    q = q.T.reshape(w.shape)[:rows, :cols]
    wt = jnp.asarray(weightage, dtype=jnp.float32)
    return (wt * q + (1.0 - wt) * w.astype(jnp.float32)).astype(w.dtype)


if __name__ == "__main__":
    key = jax.random.PRNGKey(0)
    k_w1, k_w2, k_r1, k_r2, k_q3, k_w3 = jax.random.split(key, 6)

    # Case 1: tiny 32x32 square weight -> small-size XLA fallback (semantics check).
    w1 = jax.random.normal(k_w1, (32, 32), dtype=jnp.float32)
    out1 = jax.block_until_ready(
        orthogonal_weights_forward(w1, k_r1, weightage=0.5, axis=0))
    ref1 = _reference_forward(w1, k_r1, weightage=0.5, axis=0)
    assert out1.shape == (32, 32)
    assert jnp.allclose(out1, ref1, atol=1e-5, rtol=1e-5)

    # Case 2: rectangular weight, axis=1, min_pallas_bytes=0 forces the Pallas
    # path: after transpose (192, 256) is (8,128)-aligned -> lane-dense native
    # tiling, split into >=2 "parallel" row tiles (v7x megacore).
    w2 = jax.random.normal(k_w2, (256, 192), dtype=jnp.float32)
    out2 = jax.block_until_ready(
        orthogonal_weights_forward(w2, k_r2, weightage=0.3, axis=1,
                                   min_pallas_bytes=0))
    ref2 = _reference_forward(w2, k_r2, weightage=0.3, axis=1)
    assert out2.shape == (192, 256)
    assert jnp.allclose(out2, ref2, atol=1e-5, rtol=1e-5)

    # Case 3: direct blend — multi-tile pipelined grid with ragged rows and a
    # non-128 lane edge (full-extent last dim, masked edge stores, no padding copies).
    q3 = jax.random.normal(k_q3, (520, 200), dtype=jnp.float32)
    w3 = jax.random.normal(k_w3, (520, 200), dtype=jnp.float32)
    out3 = jax.block_until_ready(_pallas_blend(q3, w3, 0.25, max_tile_rows=48))
    ref3 = 0.25 * q3 + 0.75 * w3
    assert jnp.allclose(out3, ref3, atol=1e-6, rtol=1e-6)

    # Case 4: mixed dtype — f32 q blended into a bf16 weight entirely in-kernel
    # (no host-side astype of q), f32 accumulate, single cast at the store.
    w4 = jax.random.normal(k_w1, (256, 256), dtype=jnp.float32).astype(jnp.bfloat16)
    q4 = jax.random.normal(k_r2, (256, 256), dtype=jnp.float32)
    out4 = jax.block_until_ready(_pallas_blend(q4, w4, 0.6))
    ref4 = (0.6 * q4 + 0.4 * w4.astype(jnp.float32)).astype(jnp.bfloat16)
    assert out4.dtype == jnp.bfloat16
    assert jnp.allclose(out4.astype(jnp.float32), ref4.astype(jnp.float32),
                        atol=1e-2, rtol=1e-2)

    print("KERNEL_OK")
</pallas_src>

<mosaic_0001>
module attributes {stable_mosaic.version = 11 : i64} {
  func.func @_blend_kernel(%arg0: i32, %arg1: memref<96x256xf32, #tpu.memory_space<vmem>>, %arg2: memref<96x256xf32, #tpu.memory_space<vmem>>, %arg3: memref<2xf32, #tpu.memory_space<smem>>, %arg4: memref<96x256xf32, #tpu.memory_space<vmem>>) attributes {dimension_semantics = [#tpu.dimension_semantics<parallel>], iteration_bounds = array<i64: 2>, scalar_prefetch = 0 : i64, scratch_operands = 0 : i64, tpu.core_type = #tpu.core_type<tc>, window_params = [{transform_indices = @transform_0, window_bounds = array<i64: 96, 256>}, {transform_indices = @transform_1, window_bounds = array<i64: 96, 256>}, {transform_indices = @transform_2, window_bounds = array<i64: 2>}, {transform_indices = @transform_3, window_bounds = array<i64: 96, 256>}]} {
    %c0 = arith.constant 0 : index
    %0 = memref.load %arg3[%c0] : memref<2xf32, #tpu.memory_space<smem>>
    %c1 = arith.constant 1 : index
    %1 = memref.load %arg3[%c1] : memref<2xf32, #tpu.memory_space<smem>>
    %c0_0 = arith.constant 0 : index
    %c0_1 = arith.constant 0 : index
    %2 = vector.load %arg1[%c0_0, %c0_1] : memref<96x256xf32, #tpu.memory_space<vmem>>, vector<96x256xf32>
    %c0_2 = arith.constant 0 : index
    %c0_3 = arith.constant 0 : index
    %3 = vector.load %arg2[%c0_2, %c0_3] : memref<96x256xf32, #tpu.memory_space<vmem>>, vector<96x256xf32>
    %4 = vector.broadcast %0 : f32 to vector<96x256xf32>
    %5 = arith.mulf %4, %2 : vector<96x256xf32>
    %6 = vector.broadcast %1 : f32 to vector<96x256xf32>
    %7 = arith.mulf %6, %3 : vector<96x256xf32>
    %8 = arith.addf %5, %7 : vector<96x256xf32>
    %c0_4 = arith.constant 0 : index
    %c0_5 = arith.constant 0 : index
    %9 = vector.load %arg4[%c0_4, %c0_5] : memref<96x256xf32, #tpu.memory_space<vmem>>, vector<96x256xf32>
    tpu.vector_store %arg4[%c0_4, %c0_5], %8 {strides = array<i32>} : memref<96x256xf32, #tpu.memory_space<vmem>>, vector<96x256xf32>,
    return
  }
  func.func @transform_0(%arg0: i32) -> (i32, i32) {
    %c0_i32 = arith.constant 0 : i32
    %c0_i32_0 = arith.constant 0 : i32
    return %arg0, %c0_i32 : i32, i32
  }
  func.func @transform_1(%arg0: i32) -> (i32, i32) {
    %c0_i32 = arith.constant 0 : i32
    %c0_i32_0 = arith.constant 0 : i32
    return %arg0, %c0_i32 : i32, i32
  }
  func.func @transform_2(%arg0: i32) -> i32 {
    %c0_i32 = arith.constant 0 : i32
    %c0_i32_0 = arith.constant 0 : i32
    return %c0_i32 : i32
  }
  func.func @transform_3(%arg0: i32) -> (i32, i32) {
    %c0_i32 = arith.constant 0 : i32
    %c0_i32_0 = arith.constant 0 : i32
    return %arg0, %c0_i32 : i32, i32
  }
}

</mosaic_0001>

<llo_original>
// kernel: tpu_custom_call.1
$region0: #{tpu_custom_call.1}
  #allocation0 [shape = 'u32[]', space=smem, size = 0x4, offset = 0x4, fixed_abs, tag = 'smem constant byte address 0x4 - core index']
  #allocation1 [shape = 'u32[144,128]{1,0:T(1,128)}', space=vmem, size = 0x12000, scoped, tag = 'internal scratch']
  %s0 = inlined_call_operand.hbm [shape: f32[192,256], index: 0, kind: input, shape index: {}]
  %s1 = inlined_call_operand.hbm [shape: f32[192,256], index: 1, kind: input, shape index: {}]
  %s2 = inlined_call_operand.vmem [shape: f32[2], index: 2, kind: input, shape index: {}]
  %s3 = inlined_call_operand.hbm [shape: f32[192,256], index: 3, kind: output, shape index: {}]
  %s4 = sld [smem:[#allocation0]]
  $region57: #{tpu_custom_call.1} parent=0
    _
  %s6 = ssub.s32 1, %s4
  %s7 = scalar_select 0, %s6, %s4
  $region1: #{tpu_custom_call.1} parent=0
    #allocation2 [shape = 'u8[196608]{0}', space=vmem, size = 0x30000, scoped, tag = 'input window, operand 0']
    #allocation3 [shape = 's32[2]{0}', space=sflag, size = 0x8, scoped, tag = 'scoped memory for tpu_custom_call.1']
    #allocation4 [shape = 's32[2]{0}', space=sflag, size = 0x8, scoped, tag = 'scoped memory for tpu_custom_call.1']
    #allocation5 [shape = 's32[2]{0}', space=sflag, size = 0x8, scoped, tag = 'scoped memory for tpu_custom_call.1']
    #allocation6 [shape = 'u8[196608]{0}', space=vmem, size = 0x30000, scoped, tag = 'input window, operand 1']
    #allocation7 [shape = 's32[2]{0}', space=sflag, size = 0x8, scoped, tag = 'scoped memory for tpu_custom_call.1']
    #allocation8 [shape = 'u8[512]{0}', space=smem, size = 0x200, scoped, tag = 'input window, operand 2, single buffered']
    #allocation9 [shape = 'u8[196608]{0}', space=vmem, size = 0x30000, scoped, tag = 'output window, operand 0']
    %8 = vsyncpa [#allocation3], 0
    %s9 = scalar_lea.sflag [#allocation3], 1
    %10 = vsyncpa %s9, 0
    %11 = vsyncpa [#allocation7], 0
    %s12 = scalar_lea.sflag [#allocation7], 1
    %13 = vsyncpa %s12, 0
    %14 = vsyncpa [#allocation5], 0
    %15 = vsyncpa [#allocation4], 0
    %s16 = scalar_lea.sflag [#allocation4], 1
    %17 = vsyncpa %s16, 0
    loop: start=0, step=1, limit=4
    $region2: #{tpu_custom_call.1} parent=1 // loop_pre_header
      _
    $region3: #{tpu_custom_call.1} parent=1 // loop_header
      %s19 = sphi 0, %s23
      %p20 = scmp.ge.s32.totalorder %s19, 4
      %s29 = sphi 0, %s31
      %s32 = sphi 0, %s29
      %s33 = sphi 0, %s32
      %s49 = sphi 0, %s33
      %s55 = sphi 0, %s57
      %s58 = sphi 0, %s55
      %s59 = sphi 0, %s58
      %s75 = sphi 0, %s59
      %s79 = sphi 0, %s79
      %s81 = sphi 0, %s79
      %s82 = sphi 0, %s81
      %s96 = sphi 0, %s82
      %s102 = sphi 0, %s104
      %s105 = sphi 0, %s102
      %s106 = sphi 0, %s105
      %s122 = sphi 0, %s106
    $region4: #{tpu_custom_call.1} parent=1 // loop_header_branch
      %22 = sbr.rel (%p20) target = $region8
    $region5: #{tpu_custom_call.1} parent=1 // loop_body
      %s24 = ssub.s32 %s19, 1
      %s25 = ssub.s32 %s19, 2
      %s26 = sadd.s32 %s19, 1
      %s27 = ssub.s32 %s19, %s26
      %p28 = scmp.eq.s32.totalorder %s27, 0
      %s30 = sadd.s32 %s29, 1
      %s31 = scalar_select %p28, %s29, %s30
      %p34 = pneg %p28
      %p35 = scmp.eq.s32.totalorder %s19, 1
      %p36 = por %p34, %p35
      %p37 = scmp.ne.s32.totalorder %s29, %s32
      %p38 = scmp.eq.s32.totalorder %s19, 0
      %p39 = por %p37, %p38
      %p40 = scmp.ne.s32.totalorder %s29, %s32
      %p41 = scmp.eq.s32.totalorder %s24, 1
      %p42 = por %p40, %p41
      %p43 = scmp.ne.s32.totalorder %s32, %s33
      %p44 = scmp.eq.s32.totalorder %s24, 0
      %p45 = por %p43, %p44
      %p46 = scmp.ne.s32.totalorder %s32, %s33
      %p47 = scmp.eq.s32.totalorder %s25, 1
      %p48 = por %p46, %p47
      %p50 = scmp.ne.s32.totalorder %s33, %s49
      %p51 = scmp.eq.s32.totalorder %s25, 0
      %p52 = por %p50, %p51
      %s53 = ssub.s32 %s19, %s26
      %p54 = scmp.eq.s32.totalorder %s53, 0
      %s56 = sadd.s32 %s55, 1
      %s57 = scalar_select %p54, %s55, %s56
      %p60 = pneg %p54
      %p61 = scmp.eq.s32.totalorder %s19, 1
      %p62 = por %p60, %p61
      %p63 = scmp.ne.s32.totalorder %s55, %s58
      %p64 = scmp.eq.s32.totalorder %s19, 0
      %p65 = por %p63, %p64
      %p66 = scmp.ne.s32.totalorder %s55, %s58
      %p67 = scmp.eq.s32.totalorder %s24, 1
      %p68 = por %p66, %p67
      %p69 = scmp.ne.s32.totalorder %s58, %s59
      %p70 = scmp.eq.s32.totalorder %s24, 0
      %p71 = por %p69, %p70
      %p72 = scmp.ne.s32.totalorder %s58, %s59
      %p73 = scmp.eq.s32.totalorder %s25, 1
      %p74 = por %p72, %p73
      %p76 = scmp.ne.s32.totalorder %s59, %s75
      %p77 = scmp.eq.s32.totalorder %s25, 0
      %p78 = por %p76, %p77
      %s80 = sadd.s32 %s79, 1
      %p83 = scmp.eq.s32.totalorder %s19, 1
      %p84 = scmp.ne.s32.totalorder %s79, %s81
      %p85 = scmp.eq.s32.totalorder %s19, 0
      %p86 = por %p84, %p85
      %p87 = scmp.ne.s32.totalorder %s79, %s81
      %p88 = scmp.eq.s32.totalorder %s24, 1
      %p89 = por %p87, %p88
      %p90 = scmp.ne.s32.totalorder %s81, %s82
      %p91 = scmp.eq.s32.totalorder %s24, 0
      %p92 = por %p90, %p91
      %p93 = scmp.ne.s32.totalorder %s81, %s82
      %p94 = scmp.eq.s32.totalorder %s25, 1
      %p95 = por %p93, %p94
      %p97 = scmp.ne.s32.totalorder %s82, %s96
      %p98 = scmp.eq.s32.totalorder %s25, 0
      %p99 = por %p97, %p98
      %s100 = ssub.s32 %s19, %s26
      %p101 = scmp.eq.s32.totalorder %s100, 0
      %s103 = sadd.s32 %s102, 1
      %s104 = scalar_select %p101, %s102, %s103
      %p107 = pneg %p101
      %p108 = scmp.eq.s32.totalorder %s19, 1
      %p109 = por %p107, %p108
      %p110 = scmp.ne.s32.totalorder %s102, %s105
      %p111 = scmp.eq.s32.totalorder %s19, 0
      %p112 = por %p110, %p111
      %p113 = scmp.ne.s32.totalorder %s102, %s105
      %p114 = scmp.eq.s32.totalorder %s24, 1
      %p115 = por %p113, %p114
      %p116 = scmp.ne.s32.totalorder %s105, %s106
      %p117 = scmp.eq.s32.totalorder %s24, 0
      %p118 = por %p116, %p117
      %p119 = scmp.ne.s32.totalorder %s105, %s106
      %p120 = scmp.eq.s32.totalorder %s25, 1
      %p121 = por %p119, %p120
      %p123 = scmp.ne.s32.totalorder %s106, %s122
      %p124 = scmp.eq.s32.totalorder %s25, 0
      %p125 = por %p123, %p124
      %p126 = scmp.le.s32.totalorder 1, %s19
      %p127 = scmp.lt.s32.totalorder %s19, 3
      %p128 = pnand %p126, %p127
      %p129 = pneg %p128
      // Predicated region
      $region9: #{tpu_custom_call.1} parent=5 // pred_check
        _
      $region10: #{tpu_custom_call.1} parent=5 // pred_check_branch
        %131 = sbr.rel (%p128) target = $region12
      $region11: #{tpu_custom_call.1} parent=5 // pred_region
        %s132 = ssub.s32 %s19, 1
        // Predicated region
        $region13: #{tpu_custom_call.1} parent=11 // pred_check
          %p133 = pneg %p92
        $region14: #{tpu_custom_call.1} parent=11 // pred_check_branch
          %135 = sbr.rel (%p133) target = $region16
        $region15: #{tpu_custom_call.1} parent=11 // pred_region
          %s137 = ssub.s32 16, 16
          %138 = vsyncadd [#allocation5], %s137
          %s140 = sshll.u32 %s2, 4
          %s141 = int_to_ptr.vmem [resolvable:$true] %s140
          %143 = dma.vmem_to_smem %s141, 16, [#allocation8], [#allocation5]
        $region16: #{tpu_custom_call.1} parent=11 // pred_fallthru
          _
      $region12: #{tpu_custom_call.1} parent=5 // pred_fallthru
        _
      %p144 = scmp.lt.s32.totalorder %s19, 2
      // Predicated region
      $region17: #{tpu_custom_call.1} parent=5 // pred_check
        %p145 = pneg %p144
      $region18: #{tpu_custom_call.1} parent=5 // pred_check_branch
        %147 = sbr.rel (%p145) target = $region20
      $region19: #{tpu_custom_call.1} parent=5 // pred_region
        // Predicated region
        $region21: #{tpu_custom_call.1} parent=19 // pred_check
          %p148 = pneg %p39
        $region22: #{tpu_custom_call.1} parent=19 // pred_check_branch
          %150 = sbr.rel (%p148) target = $region24
        $region23: #{tpu_custom_call.1} parent=19 // pred_region
          %s151 = sand.u32 %s29, 1
          %s152 = scalar_lea.sflag [#allocation3], %s151
          %s153 = sand.u32 %s29, 1
          %s154 = smul.addr %s153, 192
          %s155 = scalar_lea.vmem [#allocation2], %s154
          %s156 = smul.u32 12, %s19
          %s158 = ssub.s32 3072, 3072
          %159 = vsyncadd %s152, %s158
          %s160 = smul.addr %s156, 2
          %s161 = smul.addr %s160, 128
          %s162 = scalar_lea.hbm %s0, %s161
          %s163 = sshll.u32 %s155, 4
          %s164 = int_to_ptr.vmem [resolvable:$true] %s163
          %169 = dma.hbm_to_vmem [thread:$0]  %s162, 3072, %s164, %s152, 256, 256, 16
        $region24: #{tpu_custom_call.1} parent=19 // pred_fallthru
          _
        // Predicated region
        $region25: #{tpu_custom_call.1} parent=19 // pred_check
          %p170 = pneg %p65
        $region26: #{tpu_custom_call.1} parent=19 // pred_check_branch
          %172 = sbr.rel (%p170) target = $region28
        $region27: #{tpu_custom_call.1} parent=19 // pred_region
          %s173 = sand.u32 %s55, 1
          %s174 = scalar_lea.sflag [#allocation7], %s173
          %s175 = sand.u32 %s55, 1
          %s176 = smul.addr %s175, 192
          %s177 = scalar_lea.vmem [#allocation6], %s176
          %s178 = smul.u32 12, %s19
          %s180 = ssub.s32 3072, 3072
          %181 = vsyncadd %s174, %s180
          %s182 = smul.addr %s178, 2
          %s183 = smul.addr %s182, 128
          %s184 = scalar_lea.hbm %s1, %s183
          %s185 = sshll.u32 %s177, 4
          %s186 = int_to_ptr.vmem [resolvable:$true] %s185
          %191 = dma.hbm_to_vmem [thread:$0]  %s184, 3072, %s186, %s174, 256, 256, 16
        $region28: #{tpu_custom_call.1} parent=19 // pred_fallthru
          _
      $region20: #{tpu_custom_call.1} parent=5 // pred_fallthru
        _
      %p192 = scmp.le.s32.totalorder 1, %s19
      %p193 = scmp.lt.s32.totalorder %s19, 3
      %p194 = pnand %p192, %p193
      %p195 = pneg %p194
      // Predicated region
      $region29: #{tpu_custom_call.1} parent=5 // pred_check
        _
      $region30: #{tpu_custom_call.1} parent=5 // pred_check_branch
        %197 = sbr.rel (%p194) target = $region32
      $region31: #{tpu_custom_call.1} parent=5 // pred_region
        %s198 = ssub.s32 %s19, 1
        %s199 = sand.u32 %s32, 1
        %s200 = scalar_lea.sflag [#allocation3], %s199
        %s201 = sand.u32 %s32, 1
        %s202 = smul.addr %s201, 192
        %s203 = scalar_lea.vmem [#allocation2], %s202
        // Predicated region
        $region33: #{tpu_custom_call.1} parent=31 // pred_check
          %p204 = pneg %p45
        $region34: #{tpu_custom_call.1} parent=31 // pred_check_branch
          %206 = sbr.rel (%p204) target = $region36
        $region35: #{tpu_custom_call.1} parent=31 // pred_region
          %207 = dma.done %s200, 3072
        $region36: #{tpu_custom_call.1} parent=31 // pred_fallthru
          _
        %s208 = sand.u32 %s58, 1
        %s209 = scalar_lea.sflag [#allocation7], %s208
        %s210 = sand.u32 %s58, 1
        %s211 = smul.addr %s210, 192
        %s212 = scalar_lea.vmem [#allocation6], %s211
        // Predicated region
        $region37: #{tpu_custom_call.1} parent=31 // pred_check
          %p213 = pneg %p71
        $region38: #{tpu_custom_call.1} parent=31 // pred_check_branch
          %215 = sbr.rel (%p213) target = $region40
        $region39: #{tpu_custom_call.1} parent=31 // pred_region
          %216 = dma.done %s209, 3072
        $region40: #{tpu_custom_call.1} parent=31 // pred_fallthru
          _
        // Predicated region
        $region41: #{tpu_custom_call.1} parent=31 // pred_check
          %p217 = pneg %p92
        $region42: #{tpu_custom_call.1} parent=31 // pred_check_branch
          %219 = sbr.rel (%p217) target = $region44
        $region43: #{tpu_custom_call.1} parent=31 // pred_region
          %220 = dma.done [#allocation5], 16
        $region44: #{tpu_custom_call.1} parent=31 // pred_fallthru
          _
        %221 = sfence
        %s222 = sand.u32 %s32, 1
        %s223 = scalar_lea.sflag [#allocation3], %s222
        %s224 = sand.u32 %s32, 1
        %s225 = smul.addr %s224, 192
        %s226 = scalar_lea.vmem [#allocation2], %s225
        %p227 = pneg %p45
        %p228 = pneg %p42
        %s229 = sand.u32 %s58, 1
        %s230 = scalar_lea.sflag [#allocation7], %s229
        %s231 = sand.u32 %s58, 1
        %s232 = smul.addr %s231, 192
        %s233 = scalar_lea.vmem [#allocation6], %s232
        %p234 = pneg %p71
        %p235 = pneg %p68
        %p236 = pneg %p92
        %p237 = pneg %p89
        %p238 = pneg %p118
        %p239 = pneg %p115
        %s240 = sand.u32 %s105, 1
        %s241 = scalar_lea.sflag [#allocation4], %s240
        %s242 = sand.u32 %s105, 1
        %s243 = smul.addr %s242, 192
        %s244 = scalar_lea.vmem [#allocation9], %s243
        %s245 = smul.u32 12, %s24
        %s246 = smul.u32 12, %s24
        %s247 = smul.u32 12, %s24
        %s248 = sld [smem:[#allocation8]]
        %s249 = sld [smem:[#allocation8 + $0x1]]
        %v250 = vld [vmem:[%s203] sm:$0xff]
        %v251 = vld [vmem:[%s203 + $0x8] sm:$0xff]
        %v252 = vld [vmem:[%s203 + $0x10] sm:$0xff]
        %v253 = vld [vmem:[%s203 + $0x18] sm:$0xff]
        %v254 = vld [vmem:[%s203 + $0x20] sm:$0xff]
        %v255 = vld [vmem:[%s203 + $0x28] sm:$0xff]
        %v256 = vld [vmem:[%s203 + $0x30] sm:$0xff]
        %v257 = vld [vmem:[%s203 + $0x38] sm:$0xff]
        %v258 = vld [vmem:[%s203 + $0x40] sm:$0xff]
        %v259 = vld [vmem:[%s203 + $0x48] sm:$0xff]
        %v260 = vld [vmem:[%s203 + $0x50] sm:$0xff]
        %v261 = vld [vmem:[%s203 + $0x58] sm:$0xff]
        %v262 = vld [vmem:[%s203 + $0x60] sm:$0xff]
        %v263 = vld [vmem:[%s203 + $0x68] sm:$0xff]
        %v264 = vld [vmem:[%s203 + $0x70] sm:$0xff]
        %v265 = vld [vmem:[%s203 + $0x78] sm:$0xff]
        %v266 = vld [vmem:[%s203 + $0x80] sm:$0xff]
        %v267 = vld [vmem:[%s203 + $0x88] sm:$0xff]
        %v268 = vld [vmem:[%s203 + $0x90] sm:$0xff]
        %v269 = vld [vmem:[%s203 + $0x98] sm:$0xff]
        %v270 = vld [vmem:[%s203 + $0xa0] sm:$0xff]
        %v271 = vld [vmem:[%s203 + $0xa8] sm:$0xff]
        %v272 = vld [vmem:[%s203 + $0xb0] sm:$0xff]
        %v273 = vld [vmem:[%s203 + $0xb8] sm:$0xff]
        %v274 = vld [vmem:[%s212] sm:$0xff]
        %v275 = vld [vmem:[%s212 + $0x8] sm:$0xff]
        %v276 = vld [vmem:[%s212 + $0x10] sm:$0xff]
        %v277 = vld [vmem:[%s212 + $0x18] sm:$0xff]
        %v278 = vld [vmem:[%s212 + $0x20] sm:$0xff]
        %v279 = vld [vmem:[%s212 + $0x28] sm:$0xff]
        %v280 = vld [vmem:[%s212 + $0x30] sm:$0xff]
        %v281 = vld [vmem:[%s212 + $0x38] sm:$0xff]
        %v282 = vld [vmem:[%s212 + $0x40] sm:$0xff]
        %v283 = vld [vmem:[%s212 + $0x48] sm:$0xff]
        %v284 = vld [vmem:[%s212 + $0x50] sm:$0xff]
        %v285 = vld [vmem:[%s212 + $0x58] sm:$0xff]
        %v286 = vld [vmem:[%s212 + $0x60] sm:$0xff]
        %v287 = vld [vmem:[%s212 + $0x68] sm:$0xff]
        %v288 = vld [vmem:[%s212 + $0x70] sm:$0xff]
        %v289 = vld [vmem:[%s212 + $0x78] sm:$0xff]
        %v290 = vld [vmem:[%s212 + $0x80] sm:$0xff]
        %v291 = vld [vmem:[%s212 + $0x88] sm:$0xff]
        %v292 = vld [vmem:[%s212 + $0x90] sm:$0xff]
        %v293 = vld [vmem:[%s212 + $0x98] sm:$0xff]
        %v294 = vld [vmem:[%s212 + $0xa0] sm:$0xff]
        %v295 = vld [vmem:[%s212 + $0xa8] sm:$0xff]
        %v296 = vld [vmem:[%s212 + $0xb0] sm:$0xff]
        %v297 = vld [vmem:[%s212 + $0xb8] sm:$0xff]
        %v298 = vstv %s248
        %v299 = vmul.f32 %v298, %v250
        %v300 = vmul.f32 %v298, %v251
        %v301 = vmul.f32 %v298, %v252
        %v302 = vmul.f32 %v298, %v253
        %v303 = vmul.f32 %v298, %v254
        %v304 = vmul.f32 %v298, %v255
        %v305 = vmul.f32 %v298, %v256
        %v306 = vmul.f32 %v298, %v257
        %v307 = vmul.f32 %v298, %v258
        %v308 = vmul.f32 %v298, %v259
        %v309 = vmul.f32 %v298, %v260
        %v310 = vmul.f32 %v298, %v261
        %v311 = vmul.f32 %v298, %v262
        %v312 = vmul.f32 %v298, %v263
        %v313 = vmul.f32 %v298, %v264
        %v314 = vmul.f32 %v298, %v265
        %v315 = vmul.f32 %v298, %v266
        %v316 = vmul.f32 %v298, %v267
        %v317 = vmul.f32 %v298, %v268
        %v318 = vmul.f32 %v298, %v269
        %v319 = vmul.f32 %v298, %v270
        %v320 = vmul.f32 %v298, %v271
        %v321 = vmul.f32 %v298, %v272
        %v322 = vmul.f32 %v298, %v273
        %v323 = vstv %s249
        %v324 = vmul.f32 %v323, %v274
        %v325 = vmul.f32 %v323, %v275
        %v326 = vmul.f32 %v323, %v276
        %v327 = vmul.f32 %v323, %v277
        %v328 = vmul.f32 %v323, %v278
        %v329 = vmul.f32 %v323, %v279
        %v330 = vmul.f32 %v323, %v280
        %v331 = vmul.f32 %v323, %v281
        %v332 = vmul.f32 %v323, %v282
        %v333 = vmul.f32 %v323, %v283
        %v334 = vmul.f32 %v323, %v284
        %v335 = vmul.f32 %v323, %v285
        %v336 = vmul.f32 %v323, %v286
        %v337 = vmul.f32 %v323, %v287
        %v338 = vmul.f32 %v323, %v288
        %v339 = vmul.f32 %v323, %v289
        %v340 = vmul.f32 %v323, %v290
        %v341 = vmul.f32 %v323, %v291
        %v342 = vmul.f32 %v323, %v292
        %v343 = vmul.f32 %v323, %v293
        %v344 = vmul.f32 %v323, %v294
        %v345 = vmul.f32 %v323, %v295
        %v346 = vmul.f32 %v323, %v296
        %v347 = vmul.f32 %v323, %v297
        %v348 = vadd.f32 %v299, %v324
        %v349 = vadd.f32 %v300, %v325
        %v350 = vadd.f32 %v301, %v326
        %v351 = vadd.f32 %v302, %v327
        %v352 = vadd.f32 %v303, %v328
        %v353 = vadd.f32 %v304, %v329
        %v354 = vadd.f32 %v305, %v330
        %v355 = vadd.f32 %v306, %v331
        %v356 = vadd.f32 %v307, %v332
        %v357 = vadd.f32 %v308, %v333
        %v358 = vadd.f32 %v309, %v334
        %v359 = vadd.f32 %v310, %v335
        %v360 = vadd.f32 %v311, %v336
        %v361 = vadd.f32 %v312, %v337
        %v362 = vadd.f32 %v313, %v338
        %v363 = vadd.f32 %v314, %v339
        %v364 = vadd.f32 %v315, %v340
        %v365 = vadd.f32 %v316, %v341
        %v366 = vadd.f32 %v317, %v342
        %v367 = vadd.f32 %v318, %v343
        %v368 = vadd.f32 %v319, %v344
        %v369 = vadd.f32 %v320, %v345
        %v370 = vadd.f32 %v321, %v346
        %v371 = vadd.f32 %v322, %v347
        %372 = vst [vmem:[%s244] sm:$0xff] %v348
        %373 = vst [vmem:[%s244 + $0x8] sm:$0xff] %v349
        %374 = vst [vmem:[%s244 + $0x10] sm:$0xff] %v350
        %375 = vst [vmem:[%s244 + $0x18] sm:$0xff] %v351
        %376 = vst [vmem:[%s244 + $0x20] sm:$0xff] %v352
        %377 = vst [vmem:[%s244 + $0x28] sm:$0xff] %v353
        %378 = vst [vmem:[%s244 + $0x30] sm:$0xff] %v354
        %379 = vst [vmem:[%s244 + $0x38] sm:$0xff] %v355
        %380 = vst [vmem:[%s244 + $0x40] sm:$0xff] %v356
        %381 = vst [vmem:[%s244 + $0x48] sm:$0xff] %v357
        %382 = vst [vmem:[%s244 + $0x50] sm:$0xff] %v358
        %383 = vst [vmem:[%s244 + $0x58] sm:$0xff] %v359
        %384 = vst [vmem:[%s244 + $0x60] sm:$0xff] %v360
        %385 = vst [vmem:[%s244 + $0x68] sm:$0xff] %v361
        %386 = vst [vmem:[%s244 + $0x70] sm:$0xff] %v362
        %387 = vst [vmem:[%s244 + $0x78] sm:$0xff] %v363
        %388 = vst [vmem:[%s244 + $0x80] sm:$0xff] %v364
        %389 = vst [vmem:[%s244 + $0x88] sm:$0xff] %v365
        %390 = vst [vmem:[%s244 + $0x90] sm:$0xff] %v366
        %391 = vst [vmem:[%s244 + $0x98] sm:$0xff] %v367
        %392 = vst [vmem:[%s244 + $0xa0] sm:$0xff] %v368
        %393 = vst [vmem:[%s244 + $0xa8] sm:$0xff] %v369
        %394 = vst [vmem:[%s244 + $0xb0] sm:$0xff] %v370
        %395 = vst [vmem:[%s244 + $0xb8] sm:$0xff] %v371
        %s396 = sand.u32 %s105, 1
        %s397 = scalar_lea.sflag [#allocation4], %s396
        %s398 = sand.u32 %s105, 1
        %s399 = smul.addr %s398, 192
        %s400 = scalar_lea.vmem [#allocation9], %s399
        // Predicated region
        $region45: #{tpu_custom_call.1} parent=31 // pred_check
          %p401 = pneg %p115
        $region46: #{tpu_custom_call.1} parent=31 // pred_check_branch
          %403 = sbr.rel (%p401) target = $region48
        $region47: #{tpu_custom_call.1} parent=31 // pred_region
          %s404 = smul.u32 12, %s24
          %s406 = ssub.s32 3072, 3072
          %407 = vsyncadd %s397, %s406
          %s408 = smul.addr %s404, 2
          %s409 = smul.addr %s408, 128
          %s410 = scalar_lea.hbm %s3, %s409
          %s411 = sshll.u32 %s400, 4
          %s412 = int_to_ptr.vmem [resolvable:$true] %s411
          %417 = dma.vmem_to_hbm [thread:$0]  %s412, 3072, %s410, %s397, 256, 256, 16
        $region48: #{tpu_custom_call.1} parent=31 // pred_fallthru
          _
      $region32: #{tpu_custom_call.1} parent=5 // pred_fallthru
        _
      %p418 = scmp.le.s32.totalorder 2, %s19
      // Predicated region
      $region49: #{tpu_custom_call.1} parent=5 // pred_check
        %p419 = pneg %p418
      $region50: #{tpu_custom_call.1} parent=5 // pred_check_branch
        %421 = sbr.rel (%p419) target = $region52
      $region51: #{tpu_custom_call.1} parent=5 // pred_region
        %s422 = ssub.s32 %s19, 2
        // Predicated region
        $region53: #{tpu_custom_call.1} parent=51 // pred_check
          %p423 = pneg %p121
        $region54: #{tpu_custom_call.1} parent=51 // pred_check_branch
          %425 = sbr.rel (%p423) target = $region56
        $region55: #{tpu_custom_call.1} parent=51 // pred_region
          %s426 = sand.u32 %s106, 1
          %s427 = scalar_lea.sflag [#allocation4], %s426
          %s428 = sand.u32 %s106, 1
          %s429 = smul.addr %s428, 192
          %s430 = scalar_lea.vmem [#allocation9], %s429
          %431 = dma.done %s427, 3072
        $region56: #{tpu_custom_call.1} parent=51 // pred_fallthru
          _
      $region52: #{tpu_custom_call.1} parent=5 // pred_fallthru
        _
    $region6: #{tpu_custom_call.1} parent=1 // loop_footer
      %s23 = sadd.s32 1, %s19
    $region7: #{tpu_custom_call.1} parent=1 // loop_footer_branch
      %18 = sbr.rel target = $region3
    $region8: #{tpu_custom_call.1} parent=1 // loop_exit
      _
    %432 = vsyncpa [#allocation3], 1
    %s433 = scalar_lea.sflag [#allocation3], 1
    %434 = vsyncpa %s433, 1
    %435 = vsyncpa [#allocation7], 1
    %s436 = scalar_lea.sflag [#allocation7], 1
    %437 = vsyncpa %s436, 1
    %438 = vsyncpa [#allocation4], 1
    %s439 = scalar_lea.sflag [#allocation4], 1
    %440 = vsyncpa %s439, 1
    %441 = vsyncpa [#allocation5], 1
    %s442 = scalar_lea.sflag [#allocation5], 1
    %443 = vsyncpa %s442, 1

</llo_original>
